<compile_context>
chip_gen: v6e
topology: v6e:2x2x1
jax: 0.10.0
libtpu: 0.0.40
codegen_flags: <defaults>
</compile_context>

<pallas_src>
import numpy as np
import jax
import jax.numpy as jnp
from jax.experimental import pallas as pl
from jax.experimental.pallas import tpu as pltpu

_LANE = 128
# Candidate lane-dense slab widths (multiples of 128), widest first.
_WIDTHS = (4096, 2048, 1024, 512, 256, _LANE)


# ----------------------------------------------------------------------------
# Zero-copy path (default): aliased output, no DMA.
# ----------------------------------------------------------------------------
def _noop_alias_kernel(x_ref, o_ref):
    # The output HBM buffer IS the input buffer (input_output_aliases={0: 0}),
    # so the result is already in place.  No DMA, no VPU work.
    del x_ref, o_ref


def _identity_zero_copy(x: jax.Array) -> jax.Array:
    return pl.pallas_call(
        _noop_alias_kernel,
        out_shape=jax.ShapeDtypeStruct(x.shape, x.dtype),
        in_specs=[pl.BlockSpec(memory_space=pl.ANY)],
        out_specs=pl.BlockSpec(memory_space=pl.ANY),
        input_output_aliases={0: 0},
    )(x)


# ----------------------------------------------------------------------------
# Materializing-copy path (optional): real lane-dense copy.
# ----------------------------------------------------------------------------
def _copy_kernel(x_ref, o_ref):
    # Straight copy of the current tile; no casts, no extra VPU work.
    o_ref[...] = x_ref[...]


def _vmem_budget_bytes() -> int:
    """Scoped-VMEM budget for this kernel: ~half of physical VMEM, capped."""
    try:
        phys = int(pltpu.get_tpu_info().vmem_capacity_bytes)
    except Exception:
        phys = 64 << 20  # assume the most constrained generation (v7x)
    return min(phys // 2, 48 << 20)


def _lane_dense_view(x: jax.Array) -> jax.Array:
    """Reshape to a 2-D slab whose last dim is a multiple of 128 if possible."""
    total = x.size
    if x.ndim == 2 and x.shape[-1] % _LANE == 0:
        return x
    for w in _WIDTHS:
        if total % w == 0:
            return x.reshape(total // w, w)
    # Element count not a multiple of 128: present it as a single lane-major row.
    return x.reshape(1, total)


def _identity_copy_single_block(x: jax.Array, budget: int) -> jax.Array:
    # One invocation, whole tensor as a single (lane-dense) VMEM block.
    slab = _lane_dense_view(x)
    out = pl.pallas_call(
        _copy_kernel,
        out_shape=jax.ShapeDtypeStruct(slab.shape, slab.dtype),
        in_specs=[pl.BlockSpec(memory_space=pltpu.MemorySpace.VMEM)],
        out_specs=pl.BlockSpec(memory_space=pltpu.MemorySpace.VMEM),
        input_output_aliases={0: 0},
        compiler_params=pltpu.CompilerParams(vmem_limit_bytes=budget),
    )(slab)
    return out.reshape(x.shape)


def _identity_copy_tiled(x: jax.Array, budget: int) -> jax.Array:
    total = x.size
    if x.ndim == 2 and x.shape[-1] % _LANE == 0:
        slab = x
    else:
        width = next(w for w in _WIDTHS if total % w == 0)
        slab = x.reshape(-1, width)
    rows, width = slab.shape
    itemsize = jnp.dtype(x.dtype).itemsize

    # Sublane-pack alignment: 8 sublanes of 32-bit words -> 8 rows for f32,
    # 16 for bf16, 32 for int8/fp8.
    sub_align = 8 * max(1, 4 // itemsize)

    if rows <= 2 * sub_align:
        block_rows = rows  # degenerate: single full-extent block
    else:
        # in + out, double-buffered => 4x tile resident; keep ~20% headroom.
        block_rows = max(sub_align, (budget // 5) // (width * itemsize))
        # >= 2 grid steps so both TensorCores (v7x) can split the parallel axis.
        block_rows = min(block_rows, rows // 2)
        block_rows = max(sub_align, (block_rows // sub_align) * sub_align)
        # Prefer a block_rows that divides rows evenly (no masked trailing tile).
        if rows % block_rows != 0:
            for cand in range(block_rows, sub_align - 1, -sub_align):
                if rows % cand == 0:
                    block_rows = cand
                    break

    spec = pl.BlockSpec((block_rows, width), lambda i: (i, 0))
    out = pl.pallas_call(
        _copy_kernel,
        out_shape=jax.ShapeDtypeStruct(slab.shape, slab.dtype),
        grid=(pl.cdiv(rows, block_rows),),
        in_specs=[spec],
        out_specs=spec,
        input_output_aliases={0: 0},
        compiler_params=pltpu.CompilerParams(
            dimension_semantics=("parallel",),
            vmem_limit_bytes=budget,
        ),
    )(slab)
    return out.reshape(x.shape)


def identity_copy(x: jax.Array) -> jax.Array:
    """Identity that materializes a fresh output buffer (real copy)."""
    budget = _vmem_budget_bytes()
    nbytes = x.size * jnp.dtype(x.dtype).itemsize
    # Single-block keeps in + out resident (2x nbytes); require 2x headroom.
    if 4 * nbytes <= budget or x.size % _LANE != 0:
        # TODO(synk): a huge tensor whose element count is not a multiple of
        # 128 would need a pad-and-slice wrapper to use the tiled path; not
        # reachable for this module's shapes.
        return _identity_copy_single_block(x, budget)
    return _identity_copy_tiled(x, budget)


# ----------------------------------------------------------------------------
# Public entry point: forward(x) -> x
# ----------------------------------------------------------------------------
def identity(x: jax.Array) -> jax.Array:
    """Pallas identity: forward(x) -> x (same shape, dtype, values). Zero-copy."""
    try:
        return _identity_zero_copy(x)
    except Exception:
        # Defensive fallback: if ANY-space aliasing ever fails to lower on a
        # particular jax/libtpu build, fall back to a real lane-dense copy.
        return identity_copy(x)


if __name__ == "__main__":
    key = jax.random.PRNGKey(0)

    # Deployment-sized input (mnist_resnet Identity): zero-copy aliased path.
    x = jax.random.normal(key, (2, 4, 16, 16), dtype=jnp.float32)
    x_snapshot = np.asarray(x).copy()  # aliasing-safe reference copy
    y = identity(x)
    jax.block_until_ready(y)
    assert y.shape == x.shape and y.dtype == x.dtype
    assert np.array_equal(np.asarray(y), x_snapshot)

    # Materializing copy, small input: lane-dense single-block path.
    x1 = jax.random.normal(jax.random.PRNGKey(1), (2, 4, 16, 16), dtype=jnp.float32)
    x1_snapshot = np.asarray(x1).copy()
    y1 = identity_copy(x1)
    jax.block_until_ready(y1)
    assert y1.shape == x1.shape and y1.dtype == x1.dtype
    assert np.array_equal(np.asarray(y1), x1_snapshot)

    # Materializing copy, larger input (16 MiB f32): lane-dense tiled path with
    # >= 2 parallel grid steps and explicit vmem_limit_bytes.
    x2 = jax.random.normal(jax.random.PRNGKey(2), (1024, 4096), dtype=jnp.float32)
    x2_snapshot = np.asarray(x2).copy()
    y2 = identity_copy(x2)
    jax.block_until_ready(y2)
    assert y2.shape == x2.shape and y2.dtype == x2.dtype
    assert np.array_equal(np.asarray(y2), x2_snapshot)

    print("KERNEL_OK")
</pallas_src>

<mosaic_0001>
module attributes {stable_mosaic.version = 11 : i64} {
  func.func @_noop_alias_kernel(%arg0: memref<2x4x16x16xf32, #tpu.memory_space<any>>, %arg1: memref<2x4x16x16xf32, #tpu.memory_space<any>>) attributes {dimension_semantics = [], scalar_prefetch = 0 : i64, scratch_operands = 0 : i64, tpu.core_type = #tpu.core_type<tc>} {
    return
  }
}

module attributes {stable_mosaic.version = 11 : i64} {
  func.func @_copy_kernel(%arg0: memref<1x2048xf32, #tpu.memory_space<vmem>>, %arg1: memref<1x2048xf32, #tpu.memory_space<vmem>>) attributes {dimension_semantics = [], scalar_prefetch = 0 : i64, scratch_operands = 0 : i64, tpu.core_type = #tpu.core_type<tc>} {
    %c0 = arith.constant 0 : index
    %c0_0 = arith.constant 0 : index
    %0 = vector.load %arg0[%c0, %c0_0] : memref<1x2048xf32, #tpu.memory_space<vmem>>, vector<1x2048xf32>
    %c0_1 = arith.constant 0 : index
    %c0_2 = arith.constant 0 : index
    %1 = vector.load %arg1[%c0_1, %c0_2] : memref<1x2048xf32, #tpu.memory_space<vmem>>, vector<1x2048xf32>
    tpu.vector_store %arg1[%c0_1, %c0_2], %0 {strides = array<i32>} : memref<1x2048xf32, #tpu.memory_space<vmem>>, vector<1x2048xf32>,
    return
  }
}

</mosaic_0001>

<llo_original>
// kernel: tpu_custom_call.1
$region0: #{tpu_custom_call.1}
  #allocation0 [shape = 'u32[]', space=smem, size = 0x4, offset = 0x4, fixed_abs, tag = 'smem constant byte address 0x4 - core index']
  #allocation1 [shape = 'u32[144,128]{1,0:T(1,128)}', space=vmem, size = 0x12000, scoped, tag = 'internal scratch']
  %s0 = inlined_call_operand.hbm [shape: f32[2,4,16,16], index: 0, kind: input, shape index: {}, may-alias: {0,1}]
  %s1 = inlined_call_operand.hbm [shape: f32[2,4,16,16], index: 1, kind: output, shape index: {}, may-alias: {0,1}]
  %s2 = sld [smem:[#allocation0]]
  $region2: #{tpu_custom_call.1} parent=0
    _
  %s4 = ssub.s32 1, %s2
  %s5 = scalar_select 0, %s4, %s2

// kernel: tpu_custom_call.1
$region0: #{tpu_custom_call.1}
  #allocation0 [shape = 'u32[]', space=smem, size = 0x4, offset = 0x4, fixed_abs, tag = 'smem constant byte address 0x4 - core index']
  #allocation1 [shape = 'u32[144,128]{1,0:T(1,128)}', space=vmem, size = 0x12000, scoped, tag = 'internal scratch']
  %s0 = inlined_call_operand.hbm [shape: f32[1,2048], index: 0, kind: input, shape index: {}, may-alias: {0,1}]
  %s1 = inlined_call_operand.hbm [shape: f32[1,2048], index: 1, kind: output, shape index: {}, may-alias: {0,1}]
  %s2 = sld [smem:[#allocation0]]
  $region18: #{tpu_custom_call.1} parent=0
    _
  %s4 = ssub.s32 1, %s2
  %s5 = scalar_select 0, %s4, %s2
  $region1: #{tpu_custom_call.1} parent=0
    #allocation2 [shape = 'u8[8192]{0}', space=vmem, size = 0x2000, scoped, tag = 'input window, operand 0, single buffered']
    #allocation3 [shape = 's32[1]{0}', space=sflag, size = 0x4, scoped, tag = 'scoped memory for tpu_custom_call.1']
    #allocation4 [shape = 's32[1]{0}', space=sflag, size = 0x4, scoped, tag = 'scoped memory for tpu_custom_call.1']
    #allocation5 [shape = 'u8[8192]{0}', space=vmem, size = 0x2000, scoped, tag = 'output window, operand 0, single buffered']
    %6 = vsyncpa [#allocation3], 0
    %7 = vsyncpa [#allocation4], 0
    // Predicated region
    $region2: #{tpu_custom_call.1} parent=1 // pred_check
      _
    $region3: #{tpu_custom_call.1} parent=1 // pred_check_branch
      %9 = sbr.rel (0) target = $region5
    $region4: #{tpu_custom_call.1} parent=1 // pred_region
      %s11 = ssub.s32 256, 256
      %12 = vsyncadd [#allocation3], %s11
      %s14 = sshll.u32 [#allocation2], 4
      %s15 = int_to_ptr.vmem [resolvable:$true] %s14
      %17 = dma.hbm_to_vmem [thread:$0]  %s0, 256, %s15, [#allocation3]
    $region5: #{tpu_custom_call.1} parent=1 // pred_fallthru
      _
    // Predicated region
    $region6: #{tpu_custom_call.1} parent=1 // pred_check
      _
    $region7: #{tpu_custom_call.1} parent=1 // pred_check_branch
      %19 = sbr.rel (0) target = $region9
    $region8: #{tpu_custom_call.1} parent=1 // pred_region
      %20 = dma.done [#allocation3], 256
    $region9: #{tpu_custom_call.1} parent=1 // pred_fallthru
      _
    %v21 = vld [vmem:[#allocation2] sm:$0xff]
    %v22 = vld [vmem:[#allocation2 + $0x8] sm:$0xff]
    %23 = vst [vmem:[#allocation5] sm:$0xff] %v21
    %24 = vst [vmem:[#allocation5 + $0x8] sm:$0xff] %v22
    // Predicated region
    $region10: #{tpu_custom_call.1} parent=1 // pred_check
      _
    $region11: #{tpu_custom_call.1} parent=1 // pred_check_branch
      %26 = sbr.rel (0) target = $region13
    $region12: #{tpu_custom_call.1} parent=1 // pred_region
      %s28 = ssub.s32 256, 256
      %29 = vsyncadd [#allocation4], %s28
      %s31 = sshll.u32 [#allocation5], 4
      %s32 = int_to_ptr.vmem [resolvable:$true] %s31
      %34 = dma.vmem_to_hbm [thread:$0]  %s32, 256, %s1, [#allocation4]
    $region13: #{tpu_custom_call.1} parent=1 // pred_fallthru
      _
    // Predicated region
    $region14: #{tpu_custom_call.1} parent=1 // pred_check
      _
    $region15: #{tpu_custom_call.1} parent=1 // pred_check_branch
      %36 = sbr.rel (0) target = $region17
    $region16: #{tpu_custom_call.1} parent=1 // pred_region
      %37 = dma.done [#allocation4], 256
    $region17: #{tpu_custom_call.1} parent=1 // pred_fallthru
      _
    %38 = vsyncpa [#allocation3], 1
    %39 = vsyncpa [#allocation4], 1

</llo_original>
